<compile_context>
chip_gen: v7x
topology: tpu7x:2x2x1
jax: 0.10.0
libtpu: 0.0.40
codegen_flags: <defaults>
</compile_context>

<pallas_src>
import functools

import jax
import jax.numpy as jnp
from jax.experimental import pallas as pl
from jax.experimental.pallas import tpu as pltpu


def _cdiv(a, b):
    return -(-a // b)


def _ahp_ln_kernel(alpha_ref, x_ref, g_ref, b_ref, o_ref, *, eps):
    # alpha_ref:   (H,) fp32 in SMEM (scalar prefetch)
    # x_ref:       (E, tT, F)   (B and H block dims squeezed away)
    # g_ref/b_ref: (E, 1, F)
    h = pl.program_id(1)
    a = alpha_ref[h]

    x = x_ref[...].astype(jnp.float32)
    x = jnp.where(x >= 0.0, x, a * x)                   # per-head PReLU

    E, _, F = x.shape
    inv_n = 1.0 / (E * F)

    # Reduce over E first (pure cross-vreg VPU adds), then a single cross-lane
    # (XLU) reduce over F per statistic. One-pass fused mean/var in fp32.
    px = jnp.sum(x, axis=0)                             # (tT, F)
    px2 = jnp.sum(x * x, axis=0)                        # (tT, F)
    mu = jnp.sum(px, axis=-1, keepdims=True) * inv_n    # (tT, 1)
    ex2 = jnp.sum(px2, axis=-1, keepdims=True) * inv_n  # (tT, 1)
    var = jnp.maximum(ex2 - mu * mu, 0.0)               # unbiased=False
    inv_std = jax.lax.rsqrt(var + eps)                  # eps before sqrt

    mu = mu[None]                                       # (1, tT, 1)
    inv_std = inv_std[None]

    g = g_ref[...].astype(jnp.float32)                  # (E, 1, F)
    b = b_ref[...].astype(jnp.float32)
    o_ref[...] = ((x - mu) * inv_std * g + b).astype(o_ref.dtype)


def _vmem_budget_bytes():
    """Scoped VMEM budget, aware of the chip generation (v7x: 64 MiB phys)."""
    phys = 128 * 1024 * 1024
    try:
        phys = int(pltpu.get_tpu_info().vmem_capacity_bytes)
    except Exception:
        pass
    return min(phys // 2, 48 * 1024 * 1024)


def _choose_tile_t(T, E, F, itemsize, vmem_budget, tile_t=None):
    """T tile (multiple of the dtype sublane packing) so the per-step footprint
    (2x in + 2x out double buffers + ~1 fp32 temp tile) fits the VMEM budget."""
    sub = max(8, 32 // max(1, itemsize))        # 8 fp32, 16 bf16, 32 int8/fp8
    if tile_t is not None:
        return min(int(tile_t), T), sub
    footprint_mult = 4.0 + 4.0 / itemsize       # double-buffered I/O + fp32 temp
    target_bytes = int(vmem_budget * 0.5 / footprint_mult)
    target_bytes = max(512 * 1024, min(target_bytes, 8 * 1024 * 1024))
    per_row = max(1, E * F * itemsize)          # input bytes per time step
    t = (target_bytes // per_row) // sub * sub
    t = max(t, sub)
    return (T if t >= T else int(t)), sub


def _balance_megacore(B, H, T, tT, sub):
    """Make the parallel step count >= 2 and even when T allows splitting."""
    n_t = _cdiv(T, tT)
    while (B * H * n_t) % 2 != 0 and tT > sub:
        new_t = max(sub, ((tT // 2) // sub) * sub)
        if new_t == tT:
            break
        tT = new_t
        n_t = _cdiv(T, tT)
    return tT, n_t


def all_head_prelu_layer_norm_4dcf(x, gamma, beta, alpha, *, H, E, n_freqs,
                                   eps=1e-5, tile_t=None):
    """x: [B, H*E, T, n_freqs]; gamma/beta: [1, H, E, 1, n_freqs]; alpha: [H].

    Returns [B, H, E, T, n_freqs] with dtype == x.dtype (stats in fp32)."""
    B, C, T, F = x.shape
    assert C == H * E and F == n_freqs
    assert gamma.shape == (1, H, E, 1, F) and beta.shape == (1, H, E, 1, F)
    assert alpha.shape == (H,)

    x5 = x.reshape(B, H, E, T, F)               # free reshape (splits dim 1)
    alpha = alpha.astype(jnp.float32)

    vmem_budget = _vmem_budget_bytes()
    tT, sub = _choose_tile_t(T, E, F, x.dtype.itemsize, vmem_budget, tile_t)
    tT, n_t = _balance_megacore(B, H, T, tT, sub)

    x_spec = pl.BlockSpec((None, None, E, tT, F),
                          lambda b, h, t, alpha_ref: (b, h, 0, t, 0))
    p_spec = pl.BlockSpec((None, None, E, 1, F),
                          lambda b, h, t, alpha_ref: (0, h, 0, 0, 0))

    n_elem = B * H * E * T * F
    io_bytes = 2 * n_elem * x.dtype.itemsize
    param_bytes = 2 * gamma.size * gamma.dtype.itemsize * n_t * B
    cost = pl.CostEstimate(flops=10 * n_elem,
                           transcendentals=B * H * T,
                           bytes_accessed=io_bytes + param_bytes)

    return pl.pallas_call(
        functools.partial(_ahp_ln_kernel, eps=eps),
        out_shape=jax.ShapeDtypeStruct((B, H, E, T, F), x.dtype),
        grid_spec=pltpu.PrefetchScalarGridSpec(
            num_scalar_prefetch=1,                      # alpha -> SMEM
            grid=(B, H, n_t),
            in_specs=[x_spec, p_spec, p_spec],
            out_specs=x_spec,
        ),
        cost_estimate=cost,
        compiler_params=pltpu.CompilerParams(
            dimension_semantics=("parallel", "parallel", "parallel"),
            vmem_limit_bytes=vmem_budget,
        ),
    )(alpha, x5, gamma, beta)


def _reference(x, gamma, beta, alpha, H, E, n_freqs, eps=1e-5):
    B, C, T, F = x.shape
    x5 = x.reshape(B, H, E, T, F).astype(jnp.float32)
    a = alpha.reshape(1, H, 1, 1, 1).astype(jnp.float32)
    x5 = jnp.where(x5 >= 0.0, x5, a * x5)
    mu = jnp.mean(x5, axis=(2, 4), keepdims=True)
    var = jnp.mean((x5 - mu) ** 2, axis=(2, 4), keepdims=True)
    return (x5 - mu) / jnp.sqrt(var + eps) * gamma + beta


if __name__ == "__main__":
    B, H, E, T, F = 2, 4, 8, 16, 128            # input channels C = H*E = 32
    eps = 1e-5

    key = jax.random.PRNGKey(0)
    kx, kg, kb = jax.random.split(key, 3)
    x = jax.random.normal(kx, (B, H * E, T, F), dtype=jnp.float32)

    # Module __init__ uses gamma=ones, beta=zeros, alpha=0.25*ones(H); use
    # deterministic non-trivial values so the per-head alpha and per-(E,F)
    # gamma/beta paths are exercised against the reference.
    gamma = 1.0 + 0.1 * jax.random.normal(kg, (1, H, E, 1, F), dtype=jnp.float32)
    beta = 0.1 * jax.random.normal(kb, (1, H, E, 1, F), dtype=jnp.float32)
    alpha = jnp.linspace(0.1, 0.4, H, dtype=jnp.float32)

    out = all_head_prelu_layer_norm_4dcf(x, gamma, beta, alpha,
                                         H=H, E=E, n_freqs=F, eps=eps)
    out = jax.block_until_ready(out)

    ref = _reference(x, gamma, beta, alpha, H, E, F, eps)
    assert out.shape == (B, H, E, T, F)
    assert jnp.allclose(out, ref, atol=1e-4, rtol=1e-4), "mismatch vs reference"

    print("KERNEL_OK")
</pallas_src>

<mosaic_0001>
module attributes {stable_mosaic.version = 11 : i64} {
  func.func @_ahp_ln_kernel(%arg0: i32, %arg1: i32, %arg2: i32, %arg3: memref<4xf32, #tpu.memory_space<smem>>, %arg4: memref<1x1x8x16x128xf32, #tpu.memory_space<vmem>>, %arg5: memref<1x1x8x1x128xf32, #tpu.memory_space<vmem>>, %arg6: memref<1x1x8x1x128xf32, #tpu.memory_space<vmem>>, %arg7: memref<1x1x8x16x128xf32, #tpu.memory_space<vmem>>) attributes {dimension_semantics = [#tpu.dimension_semantics<parallel>, #tpu.dimension_semantics<parallel>, #tpu.dimension_semantics<parallel>], iteration_bounds = array<i64: 2, 4, 1>, scalar_prefetch = 1 : i64, scratch_operands = 0 : i64, tpu.core_type = #tpu.core_type<tc>, window_params = [{transform_indices = @transform_0, window_bounds = array<i64: 1, 1, 8, 16, 128>}, {transform_indices = @transform_1, window_bounds = array<i64: 1, 1, 8, 1, 128>}, {transform_indices = @transform_2, window_bounds = array<i64: 1, 1, 8, 1, 128>}, {transform_indices = @transform_3, window_bounds = array<i64: 1, 1, 8, 16, 128>}]} {
    %0 = arith.index_cast %arg1 : i32 to index
    %1 = memref.load %arg3[%0] : memref<4xf32, #tpu.memory_space<smem>>
    %c0 = arith.constant 0 : index
    %c0_0 = arith.constant 0 : index
    %c0_1 = arith.constant 0 : index
    %c0_2 = arith.constant 0 : index
    %c0_3 = arith.constant 0 : index
    %2 = vector.load %arg4[%c0, %c0_0, %c0_1, %c0_2, %c0_3] : memref<1x1x8x16x128xf32, #tpu.memory_space<vmem>>, vector<1x1x8x16x128xf32>
    %3 = vector.shape_cast %2 : vector<1x1x8x16x128xf32> to vector<8x16x128xf32>
    %cst = arith.constant 0.000000e+00 : f32
    %4 = vector.broadcast %cst : f32 to vector<8x16x128xf32>
    %5 = arith.cmpf oge, %3, %4 : vector<8x16x128xf32>
    %6 = vector.broadcast %1 : f32 to vector<8x16x128xf32>
    %7 = arith.mulf %6, %3 : vector<8x16x128xf32>
    %8 = arith.select %5, %3, %7 : vector<8x16x128xi1>, vector<8x16x128xf32>
    %cst_4 = arith.constant dense<0.000000e+00> : vector<16x128xf32>
    %9 = vector.multi_reduction <add>, %8, %cst_4 [0] : vector<8x16x128xf32> to vector<16x128xf32>
    %10 = arith.mulf %8, %8 : vector<8x16x128xf32>
    %cst_5 = arith.constant dense<0.000000e+00> : vector<16x128xf32>
    %11 = vector.multi_reduction <add>, %10, %cst_5 [0] : vector<8x16x128xf32> to vector<16x128xf32>
    %cst_6 = arith.constant dense<0.000000e+00> : vector<16xf32>
    %12 = vector.multi_reduction <add>, %9, %cst_6 [1] : vector<16x128xf32> to vector<16xf32>
    %13 = vector.shape_cast %12 : vector<16xf32> to vector<16x1xf32>
    %cst_7 = arith.constant 9.765625E-4 : f32
    %14 = vector.broadcast %cst_7 : f32 to vector<16x1xf32>
    %15 = arith.mulf %13, %14 : vector<16x1xf32>
    %cst_8 = arith.constant dense<0.000000e+00> : vector<16xf32>
    %16 = vector.multi_reduction <add>, %11, %cst_8 [1] : vector<16x128xf32> to vector<16xf32>
    %17 = vector.shape_cast %16 : vector<16xf32> to vector<16x1xf32>
    %cst_9 = arith.constant 9.765625E-4 : f32
    %18 = vector.broadcast %cst_9 : f32 to vector<16x1xf32>
    %19 = arith.mulf %17, %18 : vector<16x1xf32>
    %20 = arith.mulf %15, %15 : vector<16x1xf32>
    %21 = arith.subf %19, %20 : vector<16x1xf32>
    %cst_10 = arith.constant 0.000000e+00 : f32
    %22 = vector.broadcast %cst_10 : f32 to vector<16x1xf32>
    %23 = arith.maximumf %21, %22 : vector<16x1xf32>
    %cst_11 = arith.constant 9.99999974E-6 : f32
    %24 = vector.broadcast %cst_11 : f32 to vector<16x1xf32>
    %25 = arith.addf %23, %24 : vector<16x1xf32>
    %26 = math.rsqrt %25 : vector<16x1xf32>
    %27 = vector.shape_cast %15 : vector<16x1xf32> to vector<1x16x1xf32>
    %28 = vector.shape_cast %26 : vector<16x1xf32> to vector<1x16x1xf32>
    %c0_12 = arith.constant 0 : index
    %c0_13 = arith.constant 0 : index
    %c0_14 = arith.constant 0 : index
    %c0_15 = arith.constant 0 : index
    %c0_16 = arith.constant 0 : index
    %29 = vector.load %arg5[%c0_12, %c0_13, %c0_14, %c0_15, %c0_16] : memref<1x1x8x1x128xf32, #tpu.memory_space<vmem>>, vector<1x1x8x1x128xf32>
    %30 = vector.shape_cast %29 : vector<1x1x8x1x128xf32> to vector<8x1x128xf32>
    %c0_17 = arith.constant 0 : index
    %c0_18 = arith.constant 0 : index
    %c0_19 = arith.constant 0 : index
    %c0_20 = arith.constant 0 : index
    %c0_21 = arith.constant 0 : index
    %31 = vector.load %arg6[%c0_17, %c0_18, %c0_19, %c0_20, %c0_21] : memref<1x1x8x1x128xf32, #tpu.memory_space<vmem>>, vector<1x1x8x1x128xf32>
    %32 = vector.shape_cast %31 : vector<1x1x8x1x128xf32> to vector<8x1x128xf32>
    %33 = vector.broadcast %27 : vector<1x16x1xf32> to vector<8x16x128xf32>
    %34 = arith.subf %8, %33 : vector<8x16x128xf32>
    %35 = vector.broadcast %28 : vector<1x16x1xf32> to vector<8x16x128xf32>
    %36 = arith.mulf %34, %35 : vector<8x16x128xf32>
    %37 = vector.broadcast %30 : vector<8x1x128xf32> to vector<8x16x128xf32>
    %38 = arith.mulf %36, %37 : vector<8x16x128xf32>
    %39 = vector.broadcast %32 : vector<8x1x128xf32> to vector<8x16x128xf32>
    %40 = arith.addf %38, %39 : vector<8x16x128xf32>
    %c0_22 = arith.constant 0 : index
    %c0_23 = arith.constant 0 : index
    %c0_24 = arith.constant 0 : index
    %c0_25 = arith.constant 0 : index
    %c0_26 = arith.constant 0 : index
    %41 = vector.load %arg7[%c0_22, %c0_23, %c0_24, %c0_25, %c0_26] : memref<1x1x8x16x128xf32, #tpu.memory_space<vmem>>, vector<1x1x8x16x128xf32>
    %42 = vector.shape_cast %41 : vector<1x1x8x16x128xf32> to vector<8x16x128xf32>
    %43 = vector.shape_cast %40 : vector<8x16x128xf32> to vector<1x1x8x16x128xf32>
    tpu.vector_store %arg7[%c0_22, %c0_23, %c0_24, %c0_25, %c0_26], %43 {strides = array<i32>} : memref<1x1x8x16x128xf32, #tpu.memory_space<vmem>>, vector<1x1x8x16x128xf32>,
    return
  }
  func.func @transform_0(%arg0: i32, %arg1: i32, %arg2: i32, %arg3: memref<4xf32, #tpu.memory_space<smem>>) -> (i32, i32, i32, i32, i32) {
    %c0_i32 = arith.constant 0 : i32
    %c0_i32_0 = arith.constant 0 : i32
    %c0_i32_1 = arith.constant 0 : i32
    return %arg0, %arg1, %c0_i32, %arg2, %c0_i32_0 : i32, i32, i32, i32, i32
  }
  func.func @transform_1(%arg0: i32, %arg1: i32, %arg2: i32, %arg3: memref<4xf32, #tpu.memory_space<smem>>) -> (i32, i32, i32, i32, i32) {
    %c0_i32 = arith.constant 0 : i32
    %c0_i32_0 = arith.constant 0 : i32
    %c0_i32_1 = arith.constant 0 : i32
    %c0_i32_2 = arith.constant 0 : i32
    %c0_i32_3 = arith.constant 0 : i32
    return %c0_i32, %arg1, %c0_i32_0, %c0_i32_1, %c0_i32_2 : i32, i32, i32, i32, i32
  }
  func.func @transform_2(%arg0: i32, %arg1: i32, %arg2: i32, %arg3: memref<4xf32, #tpu.memory_space<smem>>) -> (i32, i32, i32, i32, i32) {
    %c0_i32 = arith.constant 0 : i32
    %c0_i32_0 = arith.constant 0 : i32
    %c0_i32_1 = arith.constant 0 : i32
    %c0_i32_2 = arith.constant 0 : i32
    %c0_i32_3 = arith.constant 0 : i32
    return %c0_i32, %arg1, %c0_i32_0, %c0_i32_1, %c0_i32_2 : i32, i32, i32, i32, i32
  }
  func.func @transform_3(%arg0: i32, %arg1: i32, %arg2: i32, %arg3: memref<4xf32, #tpu.memory_space<smem>>) -> (i32, i32, i32, i32, i32) {
    %c0_i32 = arith.constant 0 : i32
    %c0_i32_0 = arith.constant 0 : i32
    %c0_i32_1 = arith.constant 0 : i32
    return %arg0, %arg1, %c0_i32, %arg2, %c0_i32_0 : i32, i32, i32, i32, i32
  }
}

</mosaic_0001>

<llo_original>
// kernel: tpu_custom_call.1
$region0: #{tpu_custom_call.1}
  #allocation0 [shape = 'u32[]', space=smem, size = 0x4, offset = 0x4, fixed_abs, tag = 'smem constant byte address 0x4 - core index']
  #allocation1 [shape = 'u32[144,128]{1,0:T(1,128)}', space=vmem, size = 0x12000, scoped, tag = 'internal scratch']
  #allocation2 [shape = 's32[1]{0}', space=sflag, size = 0x4, scoped, tag = 'scoped memory for tpu_custom_call.1']
  #allocation3 [shape = 'u8[512]{0}', space=smem, size = 0x200, scoped, tag = 'prefetched SMEM operand 0']
  %s0 = inlined_call_operand.hbm [shape: f32[4], index: 0, kind: input, shape index: {}]
  %s1 = inlined_call_operand.hbm [shape: f32[2,4,8,16,128], index: 1, kind: input, shape index: {}]
  %s2 = inlined_call_operand.hbm [shape: f32[1,4,8,1,128], index: 2, kind: input, shape index: {}]
  %s3 = inlined_call_operand.hbm [shape: f32[1,4,8,1,128], index: 3, kind: input, shape index: {}]
  %s4 = inlined_call_operand.hbm [shape: f32[2,4,8,16,128], index: 4, kind: output, shape index: {}]
  %s5 = sld [smem:[#allocation0]]
  $region57: #{tpu_custom_call.1} parent=0
    _
  %s7 = ssub.s32 1, %s5
  %s8 = scalar_select 0, %s7, %s5
  %10 = dma.hbm_to_smem %s0, 16, [#allocation3], [#allocation2]
  %11 = dma.done [#allocation2], 16
  %12 = sfence
  $region1: #{tpu_custom_call.1} parent=0
    #allocation4 [shape = 'u8[131072]{0}', space=vmem, size = 0x20000, scoped, tag = 'input window, operand 1']
    #allocation5 [shape = 's32[2]{0}', space=sflag, size = 0x8, scoped, tag = 'scoped memory for tpu_custom_call.1']
    #allocation6 [shape = 's32[2]{0}', space=sflag, size = 0x8, scoped, tag = 'scoped memory for tpu_custom_call.1']
    #allocation7 [shape = 'u8[8192]{0}', space=vmem, size = 0x2000, scoped, tag = 'input window, operand 2']
    #allocation8 [shape = 's32[2]{0}', space=sflag, size = 0x8, scoped, tag = 'scoped memory for tpu_custom_call.1']
    #allocation9 [shape = 'u8[8192]{0}', space=vmem, size = 0x2000, scoped, tag = 'input window, operand 3']
    #allocation10 [shape = 'u8[131072]{0}', space=vmem, size = 0x20000, scoped, tag = 'output window, operand 0']
    %13 = vsyncpa [#allocation5], 0
    %s14 = scalar_lea.sflag [#allocation5], 1
    %15 = vsyncpa %s14, 0
    %16 = vsyncpa [#allocation8], 0
    %s17 = scalar_lea.sflag [#allocation8], 1
    %18 = vsyncpa %s17, 0
    %19 = vsyncpa [#allocation6], 0
    %s20 = scalar_lea.sflag [#allocation6], 1
    %21 = vsyncpa %s20, 0
    loop: start=0, step=1, limit=10
    $region2: #{tpu_custom_call.1} parent=1 // loop_pre_header
      _
    $region3: #{tpu_custom_call.1} parent=1 // loop_header
      %s23 = sphi 0, %s27
      %p24 = scmp.ge.s32.totalorder %s23, 10
      %s30 = sphi 0, %s49
      %s31 = sphi 0, %s45
      %s32 = sphi 0, %s41
      %s33 = sphi 0, %s30
      %s34 = sphi 0, %s31
      %s35 = sphi 0, %s32
      %s36 = sphi 0, %s33
      %s37 = sphi 0, %s34
      %s38 = sphi 0, %s35
      %s56 = sphi 0, %s58
      %s59 = sphi 0, %s56
      %s60 = sphi 0, %s59
      %s76 = sphi 0, %s60
      %s82 = sphi 0, %s84
      %s85 = sphi 0, %s82
      %s86 = sphi 0, %s85
      %s102 = sphi 0, %s86
      %s108 = sphi 0, %s110
      %s111 = sphi 0, %s108
      %s112 = sphi 0, %s111
      %s128 = sphi 0, %s112
      %s138 = sphi 0, %s140
      %s141 = sphi 0, %s138
      %s142 = sphi 0, %s141
      %s158 = sphi 0, %s142
    $region4: #{tpu_custom_call.1} parent=1 // loop_header_branch
      %26 = sbr.rel (%p24) target = $region8
    $region5: #{tpu_custom_call.1} parent=1 // loop_body
      %s28 = ssub.s32 %s23, 1
      %s29 = ssub.s32 %s23, 2
      %s39 = sadd.s32 1, %s32
      %p40 = scmp.ge.s32.totalorder %s39, 1
      %s41 = scalar_select %p40, 0, %s39
      %s42 = sadd.s32 1, %s31
      %s43 = scalar_select %p40, %s42, %s31
      %p44 = scmp.ge.s32.totalorder %s43, 4
      %s45 = scalar_select %p44, 0, %s43
      %s46 = sadd.s32 1, %s30
      %s47 = scalar_select %p44, %s46, %s30
      %p48 = scmp.ge.s32.totalorder %s47, 2
      %s49 = scalar_select %p48, 0, %s47
      %s50 = ssub.s32 %s30, %s49
      %s51 = ssub.s32 %s31, %s45
      %s52 = sor.u32 %s50, %s51
      %s53 = ssub.s32 %s32, %s41
      %s54 = sor.u32 %s52, %s53
      %p55 = scmp.eq.s32.totalorder %s54, 0
      %s57 = sadd.s32 %s56, 1
      %s58 = scalar_select %p55, %s56, %s57
      %p61 = pneg %p55
      %p62 = scmp.eq.s32.totalorder %s23, 7
      %p63 = por %p61, %p62
      %p64 = scmp.ne.s32.totalorder %s56, %s59
      %p65 = scmp.eq.s32.totalorder %s23, 0
      %p66 = por %p64, %p65
      %p67 = scmp.ne.s32.totalorder %s56, %s59
      %p68 = scmp.eq.s32.totalorder %s28, 7
      %p69 = por %p67, %p68
      %p70 = scmp.ne.s32.totalorder %s59, %s60
      %p71 = scmp.eq.s32.totalorder %s28, 0
      %p72 = por %p70, %p71
      %p73 = scmp.ne.s32.totalorder %s59, %s60
      %p74 = scmp.eq.s32.totalorder %s29, 7
      %p75 = por %p73, %p74
      %p77 = scmp.ne.s32.totalorder %s60, %s76
      %p78 = scmp.eq.s32.totalorder %s29, 0
      %p79 = por %p77, %p78
      %s80 = ssub.s32 %s31, %s45
      %p81 = scmp.eq.s32.totalorder %s80, 0
      %s83 = sadd.s32 %s82, 1
      %s84 = scalar_select %p81, %s82, %s83
      %p87 = pneg %p81
      %p88 = scmp.eq.s32.totalorder %s23, 7
      %p89 = por %p87, %p88
      %p90 = scmp.ne.s32.totalorder %s82, %s85
      %p91 = scmp.eq.s32.totalorder %s23, 0
      %p92 = por %p90, %p91
      %p93 = scmp.ne.s32.totalorder %s82, %s85
      %p94 = scmp.eq.s32.totalorder %s28, 7
      %p95 = por %p93, %p94
      %p96 = scmp.ne.s32.totalorder %s85, %s86
      %p97 = scmp.eq.s32.totalorder %s28, 0
      %p98 = por %p96, %p97
      %p99 = scmp.ne.s32.totalorder %s85, %s86
      %p100 = scmp.eq.s32.totalorder %s29, 7
      %p101 = por %p99, %p100
      %p103 = scmp.ne.s32.totalorder %s86, %s102
      %p104 = scmp.eq.s32.totalorder %s29, 0
      %p105 = por %p103, %p104
      %s106 = ssub.s32 %s31, %s45
      %p107 = scmp.eq.s32.totalorder %s106, 0
      %s109 = sadd.s32 %s108, 1
      %s110 = scalar_select %p107, %s108, %s109
      %p113 = pneg %p107
      %p114 = scmp.eq.s32.totalorder %s23, 7
      %p115 = por %p113, %p114
      %p116 = scmp.ne.s32.totalorder %s108, %s111
      %p117 = scmp.eq.s32.totalorder %s23, 0
      %p118 = por %p116, %p117
      %p119 = scmp.ne.s32.totalorder %s108, %s111
      %p120 = scmp.eq.s32.totalorder %s28, 7
      %p121 = por %p119, %p120
      %p122 = scmp.ne.s32.totalorder %s111, %s112
      %p123 = scmp.eq.s32.totalorder %s28, 0
      %p124 = por %p122, %p123
      %p125 = scmp.ne.s32.totalorder %s111, %s112
      %p126 = scmp.eq.s32.totalorder %s29, 7
      %p127 = por %p125, %p126
      %p129 = scmp.ne.s32.totalorder %s112, %s128
      %p130 = scmp.eq.s32.totalorder %s29, 0
      %p131 = por %p129, %p130
      %s132 = ssub.s32 %s30, %s49
      %s133 = ssub.s32 %s31, %s45
      %s134 = sor.u32 %s132, %s133
      %s135 = ssub.s32 %s32, %s41
      %s136 = sor.u32 %s134, %s135
      %p137 = scmp.eq.s32.totalorder %s136, 0
      %s139 = sadd.s32 %s138, 1
      %s140 = scalar_select %p137, %s138, %s139
      %p143 = pneg %p137
      %p144 = scmp.eq.s32.totalorder %s23, 7
      %p145 = por %p143, %p144
      %p146 = scmp.ne.s32.totalorder %s138, %s141
      %p147 = scmp.eq.s32.totalorder %s23, 0
      %p148 = por %p146, %p147
      %p149 = scmp.ne.s32.totalorder %s138, %s141
      %p150 = scmp.eq.s32.totalorder %s28, 7
      %p151 = por %p149, %p150
      %p152 = scmp.ne.s32.totalorder %s141, %s142
      %p153 = scmp.eq.s32.totalorder %s28, 0
      %p154 = por %p152, %p153
      %p155 = scmp.ne.s32.totalorder %s141, %s142
      %p156 = scmp.eq.s32.totalorder %s29, 7
      %p157 = por %p155, %p156
      %p159 = scmp.ne.s32.totalorder %s142, %s158
      %p160 = scmp.eq.s32.totalorder %s29, 0
      %p161 = por %p159, %p160
      %p162 = scmp.le.s32.totalorder 1, %s23
      %p163 = scmp.lt.s32.totalorder %s23, 9
      %p164 = pnand %p162, %p163
      %p165 = pneg %p164
      // Predicated region
      $region9: #{tpu_custom_call.1} parent=5 // pred_check
        _
      $region10: #{tpu_custom_call.1} parent=5 // pred_check_branch
        %167 = sbr.rel (%p164) target = $region12
      $region11: #{tpu_custom_call.1} parent=5 // pred_region
        %s168 = ssub.s32 %s23, 1
      $region12: #{tpu_custom_call.1} parent=5 // pred_fallthru
        _
      %p169 = scmp.lt.s32.totalorder %s23, 8
      // Predicated region
      $region13: #{tpu_custom_call.1} parent=5 // pred_check
        %p170 = pneg %p169
      $region14: #{tpu_custom_call.1} parent=5 // pred_check_branch
        %172 = sbr.rel (%p170) target = $region16
      $region15: #{tpu_custom_call.1} parent=5 // pred_region
        // Predicated region
        $region17: #{tpu_custom_call.1} parent=15 // pred_check
          %p173 = pneg %p66
        $region18: #{tpu_custom_call.1} parent=15 // pred_check_branch
          %175 = sbr.rel (%p173) target = $region20
        $region19: #{tpu_custom_call.1} parent=15 // pred_region
          %s176 = sand.u32 %s56, 1
          %s177 = scalar_lea.sflag [#allocation5], %s176
          %s178 = sand.u32 %s56, 1
          %s179 = smul.addr %s178, 128
          %s180 = scalar_lea.vmem [#allocation4], %s179
          %s181 = smul.u32 2, %s32
          %s183 = ssub.s32 2048, 2048
          %184 = vsyncadd %s177, %s183
          %s185 = smul.addr %s31, 16
          %s186 = sadd.s32 %s181, %s185
          %s187 = smul.addr %s30, 64
          %s188 = sadd.s32 %s186, %s187
          %s189 = smul.addr %s188, 128
          %s190 = scalar_lea.hbm %s1, %s189
          %s191 = sshll.u32 %s180, 4
          %s192 = int_to_ptr.vmem [resolvable:$true] %s191
          %197 = dma.hbm_to_vmem [thread:$0]  %s190, 2048, %s192, %s177, 128, 128, 8
        $region20: #{tpu_custom_call.1} parent=15 // pred_fallthru
          _
        // Predicated region
        $region21: #{tpu_custom_call.1} parent=15 // pred_check
          %p198 = pneg %p92
        $region22: #{tpu_custom_call.1} parent=15 // pred_check_branch
          %200 = sbr.rel (%p198) target = $region24
        $region23: #{tpu_custom_call.1} parent=15 // pred_region
          %s201 = sand.u32 %s23, 1
          %s202 = scalar_lea.sflag [#allocation8], %s201
          %s203 = sand.u32 %s82, 1
          %s204 = smul.addr %s203, 8
          %s205 = scalar_lea.vmem [#allocation7], %s204
          %s207 = ssub.s32 128, 128
          %208 = vsyncadd %s202, %s207
          %s209 = smul.addr %s31, 8
          %s210 = smul.addr %s209, 16
          %s211 = scalar_lea.hbm %s2, %s210
          %s212 = sshll.u32 %s205, 4
          %s213 = int_to_ptr.vmem [resolvable:$true] %s212
          %218 = dma.hbm_to_vmem [thread:$0]  %s211, 128, %s213, %s202, 16, 16, 1
        $region24: #{tpu_custom_call.1} parent=15 // pred_fallthru
          _
        // Predicated region
        $region25: #{tpu_custom_call.1} parent=15 // pred_check
          %p219 = pneg %p118
        $region26: #{tpu_custom_call.1} parent=15 // pred_check_branch
          %221 = sbr.rel (%p219) target = $region28
        $region27: #{tpu_custom_call.1} parent=15 // pred_region
          %s222 = sand.u32 %s23, 1
          %s223 = scalar_lea.sflag [#allocation8], %s222
          %s224 = sand.u32 %s108, 1
          %s225 = smul.addr %s224, 8
          %s226 = scalar_lea.vmem [#allocation9], %s225
          %s228 = ssub.s32 128, 128
          %229 = vsyncadd %s223, %s228
          %s230 = smul.addr %s31, 8
          %s231 = smul.addr %s230, 16
          %s232 = scalar_lea.hbm %s3, %s231
          %s233 = sshll.u32 %s226, 4
          %s234 = int_to_ptr.vmem [resolvable:$true] %s233
          %239 = dma.hbm_to_vmem [thread:$0]  %s232, 128, %s234, %s223, 16, 16, 1
        $region28: #{tpu_custom_call.1} parent=15 // pred_fallthru
          _
      $region16: #{tpu_custom_call.1} parent=5 // pred_fallthru
        _
      %p240 = scmp.le.s32.totalorder 1, %s23
      %p241 = scmp.lt.s32.totalorder %s23, 9
      %p242 = pnand %p240, %p241
      %p243 = pneg %p242
      // Predicated region
      $region29: #{tpu_custom_call.1} parent=5 // pred_check
        _
      $region30: #{tpu_custom_call.1} parent=5 // pred_check_branch
        %245 = sbr.rel (%p242) target = $region32
      $region31: #{tpu_custom_call.1} parent=5 // pred_region
        %s246 = ssub.s32 %s23, 1
        %s247 = sand.u32 %s59, 1
        %s248 = scalar_lea.sflag [#allocation5], %s247
        %s249 = sand.u32 %s59, 1
        %s250 = smul.addr %s249, 128
        %s251 = scalar_lea.vmem [#allocation4], %s250
        // Predicated region
        $region33: #{tpu_custom_call.1} parent=31 // pred_check
          %p252 = pneg %p72
        $region34: #{tpu_custom_call.1} parent=31 // pred_check_branch
          %254 = sbr.rel (%p252) target = $region36
        $region35: #{tpu_custom_call.1} parent=31 // pred_region
          %255 = dma.done %s248, 2048
        $region36: #{tpu_custom_call.1} parent=31 // pred_fallthru
          _
        %s256 = sand.u32 %s28, 1
        %s257 = scalar_lea.sflag [#allocation8], %s256
        %s258 = sand.u32 %s85, 1
        %s259 = smul.addr %s258, 8
        %s260 = scalar_lea.vmem [#allocation7], %s259
        // Predicated region
        $region37: #{tpu_custom_call.1} parent=31 // pred_check
          %p261 = pneg %p98
        $region38: #{tpu_custom_call.1} parent=31 // pred_check_branch
          %263 = sbr.rel (%p261) target = $region40
        $region39: #{tpu_custom_call.1} parent=31 // pred_region
          %264 = dma.done %s257, 128
        $region40: #{tpu_custom_call.1} parent=31 // pred_fallthru
          _
        %s265 = sand.u32 %s28, 1
        %s266 = scalar_lea.sflag [#allocation8], %s265
        %s267 = sand.u32 %s111, 1
        %s268 = smul.addr %s267, 8
        %s269 = scalar_lea.vmem [#allocation9], %s268
        // Predicated region
        $region41: #{tpu_custom_call.1} parent=31 // pred_check
          %p270 = pneg %p124
        $region42: #{tpu_custom_call.1} parent=31 // pred_check_branch
          %272 = sbr.rel (%p270) target = $region44
        $region43: #{tpu_custom_call.1} parent=31 // pred_region
          %273 = dma.done %s266, 128
        $region44: #{tpu_custom_call.1} parent=31 // pred_fallthru
          _
        %s274 = sand.u32 %s59, 1
        %s275 = scalar_lea.sflag [#allocation5], %s274
        %s276 = sand.u32 %s59, 1
        %s277 = smul.addr %s276, 128
        %s278 = scalar_lea.vmem [#allocation4], %s277
        %p279 = pneg %p72
        %p280 = pneg %p69
        %s281 = sand.u32 %s28, 1
        %s282 = scalar_lea.sflag [#allocation8], %s281
        %s283 = sand.u32 %s85, 1
        %s284 = smul.addr %s283, 8
        %s285 = scalar_lea.vmem [#allocation7], %s284
        %p286 = pneg %p98
        %p287 = pneg %p95
        %s288 = sand.u32 %s28, 1
        %s289 = scalar_lea.sflag [#allocation8], %s288
        %s290 = sand.u32 %s111, 1
        %s291 = smul.addr %s290, 8
        %s292 = scalar_lea.vmem [#allocation9], %s291
        %p293 = pneg %p124
        %p294 = pneg %p121
        %p295 = pneg %p154
        %p296 = pneg %p151
        %s297 = sand.u32 %s141, 1
        %s298 = scalar_lea.sflag [#allocation6], %s297
        %s299 = sand.u32 %s141, 1
        %s300 = smul.addr %s299, 128
        %s301 = scalar_lea.vmem [#allocation10], %s300
        %s302 = smul.u32 2, %s35
        %s303 = smul.u32 2, %s35
        %s304 = sld [smem:[#allocation3 + %s34]]
        %v305 = vld [vmem:[%s251] sm:$0xff]
        %v306 = vld [vmem:[%s251 + $0x8] sm:$0xff]
        %v307 = vld [vmem:[%s251 + $0x10] sm:$0xff]
        %v308 = vld [vmem:[%s251 + $0x18] sm:$0xff]
        %v309 = vld [vmem:[%s251 + $0x20] sm:$0xff]
        %v310 = vld [vmem:[%s251 + $0x28] sm:$0xff]
        %v311 = vld [vmem:[%s251 + $0x30] sm:$0xff]
        %v312 = vld [vmem:[%s251 + $0x38] sm:$0xff]
        %v313 = vld [vmem:[%s251 + $0x40] sm:$0xff]
        %v314 = vld [vmem:[%s251 + $0x48] sm:$0xff]
        %v315 = vld [vmem:[%s251 + $0x50] sm:$0xff]
        %v316 = vld [vmem:[%s251 + $0x58] sm:$0xff]
        %v317 = vld [vmem:[%s251 + $0x60] sm:$0xff]
        %v318 = vld [vmem:[%s251 + $0x68] sm:$0xff]
        %v319 = vld [vmem:[%s251 + $0x70] sm:$0xff]
        %v320 = vld [vmem:[%s251 + $0x78] sm:$0xff]
        %vm321 = vcmp.ge.f32.partialorder %v305, 0.0
        %vm322 = vcmp.ge.f32.partialorder %v306, 0.0
        %vm323 = vcmp.ge.f32.partialorder %v307, 0.0
        %vm324 = vcmp.ge.f32.partialorder %v308, 0.0
        %vm325 = vcmp.ge.f32.partialorder %v309, 0.0
        %vm326 = vcmp.ge.f32.partialorder %v310, 0.0
        %vm327 = vcmp.ge.f32.partialorder %v311, 0.0
        %vm328 = vcmp.ge.f32.partialorder %v312, 0.0
        %vm329 = vcmp.ge.f32.partialorder %v313, 0.0
        %vm330 = vcmp.ge.f32.partialorder %v314, 0.0
        %vm331 = vcmp.ge.f32.partialorder %v315, 0.0
        %vm332 = vcmp.ge.f32.partialorder %v316, 0.0
        %vm333 = vcmp.ge.f32.partialorder %v317, 0.0
        %vm334 = vcmp.ge.f32.partialorder %v318, 0.0
        %vm335 = vcmp.ge.f32.partialorder %v319, 0.0
        %vm336 = vcmp.ge.f32.partialorder %v320, 0.0
        %v337 = vstv %s304
        %v338 = vmul.f32 %v337, %v305
        %v339 = vmul.f32 %v337, %v306
        %v340 = vmul.f32 %v337, %v307
        %v341 = vmul.f32 %v337, %v308
        %v342 = vmul.f32 %v337, %v309
        %v343 = vmul.f32 %v337, %v310
        %v344 = vmul.f32 %v337, %v311
        %v345 = vmul.f32 %v337, %v312
        %v346 = vmul.f32 %v337, %v313
        %v347 = vmul.f32 %v337, %v314
        %v348 = vmul.f32 %v337, %v315
        %v349 = vmul.f32 %v337, %v316
        %v350 = vmul.f32 %v337, %v317
        %v351 = vmul.f32 %v337, %v318
        %v352 = vmul.f32 %v337, %v319
        %v353 = vmul.f32 %v337, %v320
        %v354 = vsel %vm321, %v305, %v338
        %v355 = vsel %vm322, %v306, %v339
        %v356 = vsel %vm323, %v307, %v340
        %v357 = vsel %vm324, %v308, %v341
        %v358 = vsel %vm325, %v309, %v342
        %v359 = vsel %vm326, %v310, %v343
        %v360 = vsel %vm327, %v311, %v344
        %v361 = vsel %vm328, %v312, %v345
        %v362 = vsel %vm329, %v313, %v346
        %v363 = vsel %vm330, %v314, %v347
        %v364 = vsel %vm331, %v315, %v348
        %v365 = vsel %vm332, %v316, %v349
        %v366 = vsel %vm333, %v317, %v350
        %v367 = vsel %vm334, %v318, %v351
        %v368 = vsel %vm335, %v319, %v352
        %v369 = vsel %vm336, %v320, %v353
        %v370 = vadd.f32 %v354, %v356
        %v371 = vadd.f32 %v370, %v358
        %v372 = vadd.f32 %v371, %v360
        %v373 = vadd.f32 %v372, %v362
        %v374 = vadd.f32 %v373, %v364
        %v375 = vadd.f32 %v374, %v366
        %v376 = vadd.f32 %v375, %v368
        %v377 = vadd.f32 %v355, %v357
        %v378 = vadd.f32 %v377, %v359
        %v379 = vadd.f32 %v378, %v361
        %v380 = vadd.f32 %v379, %v363
        %v381 = vadd.f32 %v380, %v365
        %v382 = vadd.f32 %v381, %v367
        %v383 = vadd.f32 %v382, %v369
        %v384 = vmul.f32 %v354, %v354
        %v385 = vmul.f32 %v355, %v355
        %v386 = vmul.f32 %v356, %v356
        %v387 = vmul.f32 %v357, %v357
        %v388 = vmul.f32 %v358, %v358
        %v389 = vmul.f32 %v359, %v359
        %v390 = vmul.f32 %v360, %v360
        %v391 = vmul.f32 %v361, %v361
        %v392 = vmul.f32 %v362, %v362
        %v393 = vmul.f32 %v363, %v363
        %v394 = vmul.f32 %v364, %v364
        %v395 = vmul.f32 %v365, %v365
        %v396 = vmul.f32 %v366, %v366
        %v397 = vmul.f32 %v367, %v367
        %v398 = vmul.f32 %v368, %v368
        %v399 = vmul.f32 %v369, %v369
        %v400 = vadd.f32 %v384, %v386
        %v401 = vadd.f32 %v400, %v388
        %v402 = vadd.f32 %v401, %v390
        %v403 = vadd.f32 %v402, %v392
        %v404 = vadd.f32 %v403, %v394
        %v405 = vadd.f32 %v404, %v396
        %v406 = vadd.f32 %v405, %v398
        %v407 = vadd.f32 %v385, %v387
        %v408 = vadd.f32 %v407, %v389
        %v409 = vadd.f32 %v408, %v391
        %v410 = vadd.f32 %v409, %v393
        %v411 = vadd.f32 %v410, %v395
        %v412 = vadd.f32 %v411, %v397
        %v413 = vadd.f32 %v412, %v399
        %414 = vadd.xlane.f32.xlu0 %v376
        %v415 = vpop.xlane.xlu0 %414
        %416 = vadd.xlane.f32.xlu0 %v383
        %v417 = vpop.xlane.xlu0 %416
        %v418 = vmul.f32 %v415, 0.0009765625
        %v419 = vmul.f32 %v417, 0.0009765625
        %420 = vadd.xlane.f32.xlu0 %v406
        %v421 = vpop.xlane.xlu0 %420
        %422 = vadd.xlane.f32.xlu0 %v413
        %v423 = vpop.xlane.xlu0 %422
        %v424 = vmul.f32 %v421, 0.0009765625
        %v425 = vmul.f32 %v423, 0.0009765625
        %v426 = vmul.f32 %v418, %v418
        %v427 = vmul.f32 %v419, %v419
        %v428 = vsub.f32 %v424, %v426
        %v429 = vsub.f32 %v425, %v427
        %v430 = vmax.f32 %v428, 0.0
        %v431 = vmax.f32 %v429, 0.0
        %v432 = vadd.f32 %v430, 1e-05
        %v433 = vadd.f32 %v431, 1e-05
        %v434 = vrsqrt.pop %v432
        %v435 = vrsqrt.pop %v433
        %v436 = vld [vmem:[%s260] sm:$0x1]
        %v437 = vld [vmem:[%s260 + $0x1] sm:$0x1]
        %v438 = vld [vmem:[%s260 + $0x2] sm:$0x1]
        %v439 = vld [vmem:[%s260 + $0x3] sm:$0x1]
        %v440 = vld [vmem:[%s260 + $0x4] sm:$0x1]
        %v441 = vld [vmem:[%s260 + $0x5] sm:$0x1]
        %v442 = vld [vmem:[%s260 + $0x6] sm:$0x1]
        %v443 = vld [vmem:[%s260 + $0x7] sm:$0x1]
        %v444 = vld [vmem:[%s269] sm:$0x1]
        %v445 = vld [vmem:[%s269 + $0x1] sm:$0x1]
        %v446 = vld [vmem:[%s269 + $0x2] sm:$0x1]
        %v447 = vld [vmem:[%s269 + $0x3] sm:$0x1]
        %v448 = vld [vmem:[%s269 + $0x4] sm:$0x1]
        %v449 = vld [vmem:[%s269 + $0x5] sm:$0x1]
        %v450 = vld [vmem:[%s269 + $0x6] sm:$0x1]
        %v451 = vld [vmem:[%s269 + $0x7] sm:$0x1]
        %v452 = vsub.f32 %v354, %v418
        %v453 = vsub.f32 %v355, %v419
        %v454 = vsub.f32 %v356, %v418
        %v455 = vsub.f32 %v357, %v419
        %v456 = vsub.f32 %v358, %v418
        %v457 = vsub.f32 %v359, %v419
        %v458 = vsub.f32 %v360, %v418
        %v459 = vsub.f32 %v361, %v419
        %v460 = vsub.f32 %v362, %v418
        %v461 = vsub.f32 %v363, %v419
        %v462 = vsub.f32 %v364, %v418
        %v463 = vsub.f32 %v365, %v419
        %v464 = vsub.f32 %v366, %v418
        %v465 = vsub.f32 %v367, %v419
        %v466 = vsub.f32 %v368, %v418
        %v467 = vsub.f32 %v369, %v419
        %v468 = vmul.f32 %v452, %v434
        %v469 = vmul.f32 %v453, %v435
        %v470 = vmul.f32 %v454, %v434
        %v471 = vmul.f32 %v455, %v435
        %v472 = vmul.f32 %v456, %v434
        %v473 = vmul.f32 %v457, %v435
        %v474 = vmul.f32 %v458, %v434
        %v475 = vmul.f32 %v459, %v435
        %v476 = vmul.f32 %v460, %v434
        %v477 = vmul.f32 %v461, %v435
        %v478 = vmul.f32 %v462, %v434
        %v479 = vmul.f32 %v463, %v435
        %v480 = vmul.f32 %v464, %v434
        %v481 = vmul.f32 %v465, %v435
        %v482 = vmul.f32 %v466, %v434
        %v483 = vmul.f32 %v467, %v435
        %v492 = vlaneseq
        %v493 = vshrl.u32 %v492, 7
        %v494 = vsub.s32 0, %v493
        %v495 = vrot.slane %v436, %v494
        %v496 = vlaneseq
        %v497 = vshrl.u32 %v496, 7
        %v498 = vsub.s32 0, %v497
        %v499 = vrot.slane %v437, %v498
        %v500 = vlaneseq
        %v501 = vshrl.u32 %v500, 7
        %v502 = vsub.s32 0, %v501
        %v503 = vrot.slane %v438, %v502
        %v504 = vlaneseq
        %v505 = vshrl.u32 %v504, 7
        %v506 = vsub.s32 0, %v505
        %v507 = vrot.slane %v439, %v506
        %v508 = vlaneseq
        %v509 = vshrl.u32 %v508, 7
        %v510 = vsub.s32 0, %v509
        %v511 = vrot.slane %v440, %v510
        %v512 = vlaneseq
        %v513 = vshrl.u32 %v512, 7
        %v514 = vsub.s32 0, %v513
        %v515 = vrot.slane %v441, %v514
        %v516 = vlaneseq
        %v517 = vshrl.u32 %v516, 7
        %v518 = vsub.s32 0, %v517
        %v519 = vrot.slane %v442, %v518
        %v520 = vlaneseq
        %v521 = vshrl.u32 %v520, 7
        %v522 = vsub.s32 0, %v521
        %v523 = vrot.slane %v443, %v522
        %v532 = vmul.f32 %v468, %v495
        %v533 = vmul.f32 %v469, %v495
        %v534 = vmul.f32 %v470, %v499
        %v535 = vmul.f32 %v471, %v499
        %v536 = vmul.f32 %v472, %v503
        %v537 = vmul.f32 %v473, %v503
        %v538 = vmul.f32 %v474, %v507
        %v539 = vmul.f32 %v475, %v507
        %v540 = vmul.f32 %v476, %v511
        %v541 = vmul.f32 %v477, %v511
        %v542 = vmul.f32 %v478, %v515
        %v543 = vmul.f32 %v479, %v515
        %v544 = vmul.f32 %v480, %v519
        %v545 = vmul.f32 %v481, %v519
        %v546 = vmul.f32 %v482, %v523
        %v547 = vmul.f32 %v483, %v523
        %v556 = vlaneseq
        %v557 = vshrl.u32 %v556, 7
        %v558 = vsub.s32 0, %v557
        %v559 = vrot.slane %v444, %v558
        %v560 = vlaneseq
        %v561 = vshrl.u32 %v560, 7
        %v562 = vsub.s32 0, %v561
        %v563 = vrot.slane %v445, %v562
        %v564 = vlaneseq
        %v565 = vshrl.u32 %v564, 7
        %v566 = vsub.s32 0, %v565
        %v567 = vrot.slane %v446, %v566
        %v568 = vlaneseq
        %v569 = vshrl.u32 %v568, 7
        %v570 = vsub.s32 0, %v569
        %v571 = vrot.slane %v447, %v570
        %v572 = vlaneseq
        %v573 = vshrl.u32 %v572, 7
        %v574 = vsub.s32 0, %v573
        %v575 = vrot.slane %v448, %v574
        %v576 = vlaneseq
        %v577 = vshrl.u32 %v576, 7
        %v578 = vsub.s32 0, %v577
        %v579 = vrot.slane %v449, %v578
        %v580 = vlaneseq
        %v581 = vshrl.u32 %v580, 7
        %v582 = vsub.s32 0, %v581
        %v583 = vrot.slane %v450, %v582
        %v584 = vlaneseq
        %v585 = vshrl.u32 %v584, 7
        %v586 = vsub.s32 0, %v585
        %v587 = vrot.slane %v451, %v586
        %v596 = vadd.f32 %v532, %v559
        %v597 = vadd.f32 %v533, %v559
        %v598 = vadd.f32 %v534, %v563
        %v599 = vadd.f32 %v535, %v563
        %v600 = vadd.f32 %v536, %v567
        %v601 = vadd.f32 %v537, %v567
        %v602 = vadd.f32 %v538, %v571
        %v603 = vadd.f32 %v539, %v571
        %v604 = vadd.f32 %v540, %v575
        %v605 = vadd.f32 %v541, %v575
        %v606 = vadd.f32 %v542, %v579
        %v607 = vadd.f32 %v543, %v579
        %v608 = vadd.f32 %v544, %v583
        %v609 = vadd.f32 %v545, %v583
        %v610 = vadd.f32 %v546, %v587
        %v611 = vadd.f32 %v547, %v587
        %612 = vst [vmem:[%s301] sm:$0xff] %v596
        %613 = vst [vmem:[%s301 + $0x8] sm:$0xff] %v597
        %614 = vst [vmem:[%s301 + $0x10] sm:$0xff] %v598
        %615 = vst [vmem:[%s301 + $0x18] sm:$0xff] %v599
        %616 = vst [vmem:[%s301 + $0x20] sm:$0xff] %v600
        %617 = vst [vmem:[%s301 + $0x28] sm:$0xff] %v601
        %618 = vst [vmem:[%s301 + $0x30] sm:$0xff] %v602
        %619 = vst [vmem:[%s301 + $0x38] sm:$0xff] %v603
        %620 = vst [vmem:[%s301 + $0x40] sm:$0xff] %v604
        %621 = vst [vmem:[%s301 + $0x48] sm:$0xff] %v605
        %622 = vst [vmem:[%s301 + $0x50] sm:$0xff] %v606
        %623 = vst [vmem:[%s301 + $0x58] sm:$0xff] %v607
        %624 = vst [vmem:[%s301 + $0x60] sm:$0xff] %v608
        %625 = vst [vmem:[%s301 + $0x68] sm:$0xff] %v609
        %626 = vst [vmem:[%s301 + $0x70] sm:$0xff] %v610
        %627 = vst [vmem:[%s301 + $0x78] sm:$0xff] %v611
        %s628 = sand.u32 %s141, 1
        %s629 = scalar_lea.sflag [#allocation6], %s628
        %s630 = sand.u32 %s141, 1
        %s631 = smul.addr %s630, 128
        %s632 = scalar_lea.vmem [#allocation10], %s631
        // Predicated region
        $region45: #{tpu_custom_call.1} parent=31 // pred_check
          %p633 = pneg %p151
        $region46: #{tpu_custom_call.1} parent=31 // pred_check_branch
          %635 = sbr.rel (%p633) target = $region48
        $region47: #{tpu_custom_call.1} parent=31 // pred_region
          %s636 = smul.u32 2, %s35
          %s638 = ssub.s32 2048, 2048
          %639 = vsyncadd %s629, %s638
          %s640 = smul.addr %s34, 16
          %s641 = sadd.s32 %s636, %s640
          %s642 = smul.addr %s33, 64
          %s643 = sadd.s32 %s641, %s642
          %s644 = smul.addr %s643, 128
          %s645 = scalar_lea.hbm %s4, %s644
          %s646 = sshll.u32 %s632, 4
          %s647 = int_to_ptr.vmem [resolvable:$true] %s646
          %652 = dma.vmem_to_hbm [thread:$0]  %s647, 2048, %s645, %s629, 128, 128, 8
        $region48: #{tpu_custom_call.1} parent=31 // pred_fallthru
          _
      $region32: #{tpu_custom_call.1} parent=5 // pred_fallthru
        _
      %p653 = scmp.le.s32.totalorder 2, %s23
      // Predicated region
      $region49: #{tpu_custom_call.1} parent=5 // pred_check
        %p654 = pneg %p653
      $region50: #{tpu_custom_call.1} parent=5 // pred_check_branch
        %656 = sbr.rel (%p654) target = $region52
      $region51: #{tpu_custom_call.1} parent=5 // pred_region
        %s657 = ssub.s32 %s23, 2
        // Predicated region
        $region53: #{tpu_custom_call.1} parent=51 // pred_check
          %p658 = pneg %p157
        $region54: #{tpu_custom_call.1} parent=51 // pred_check_branch
          %660 = sbr.rel (%p658) target = $region56
        $region55: #{tpu_custom_call.1} parent=51 // pred_region
          %s661 = sand.u32 %s142, 1
          %s662 = scalar_lea.sflag [#allocation6], %s661
          %s663 = sand.u32 %s142, 1
          %s664 = smul.addr %s663, 128
          %s665 = scalar_lea.vmem [#allocation10], %s664
          %666 = dma.done %s662, 2048
        $region56: #{tpu_custom_call.1} parent=51 // pred_fallthru
          _
      $region52: #{tpu_custom_call.1} parent=5 // pred_fallthru
        _
    $region6: #{tpu_custom_call.1} parent=1 // loop_footer
      %s27 = sadd.s32 1, %s23
    $region7: #{tpu_custom_call.1} parent=1 // loop_footer_branch
      %22 = sbr.rel target = $region3
    $region8: #{tpu_custom_call.1} parent=1 // loop_exit
      _
    %667 = vsyncpa [#allocation5], 1
    %s668 = scalar_lea.sflag [#allocation5], 1
    %669 = vsyncpa %s668, 1
    %670 = vsyncpa [#allocation8], 1
    %s671 = scalar_lea.sflag [#allocation8], 1
    %672 = vsyncpa %s671, 1
    %673 = vsyncpa [#allocation6], 1
    %s674 = scalar_lea.sflag [#allocation6], 1
    %675 = vsyncpa %s674, 1

</llo_original>
